<compile_context>
chip_gen: v7x
topology: tpu7x:2x2x1
jax: 0.10.0
libtpu: 0.0.40
codegen_flags: <defaults>
</compile_context>

<pallas_src>
import functools

import jax
import jax.numpy as jnp
from jax.experimental import pallas as pl
from jax.experimental.pallas import tpu as pltpu

C_PAD = 128  # lane-dense padded class width for the kernel output


# ----------------------------------------------------------------------------
# Fused Pallas kernel (one block, all scenarios):
#   h      = relu( (A_flat @ X) @ W1 + b1 )        A_flat: (S*N, N), h: (S*N, H)
#   agg2   = A_sel @ h                             A_sel : (S, S*N) block-diag
#   logits = agg2 @ W2 + b2                        (S, C_PAD), node_idx row only
# All feeds and accumulation are float32.
# ----------------------------------------------------------------------------
def _fused_gnn_kernel(a_flat_ref, a_sel_ref, x_ref, w1_ref, b1_ref,
                      w2_ref, b2_ref, o_ref):
    # --- layer 1: one batched aggregation + dense transform + relu ---
    agg1 = jnp.dot(a_flat_ref[...], x_ref[...],
                   preferred_element_type=jnp.float32)          # (S*N, F)
    h = jnp.dot(agg1, w1_ref[...],
                preferred_element_type=jnp.float32) + b1_ref[...]
    h = jnp.maximum(h, 0.0)                                     # (S*N, H)

    # --- layer 2: node_idx row of every scenario in ONE matmul via the
    #     block-diagonal selector (A_sel[s, s*N + n] = A[s, node_idx, n]) ---
    agg2 = jnp.dot(a_sel_ref[...], h,
                   preferred_element_type=jnp.float32)          # (S, H)
    logits = jnp.dot(agg2, w2_ref[...],
                     preferred_element_type=jnp.float32) + b2_ref[...]

    o_ref[...] = logits.astype(o_ref.dtype)                     # (S, C_PAD)


def fused_gnn_forward(a_flat, a_sel, x, w1, b1, w2, b2):
    """Single fused forward over all scenarios.

    a_flat: (S*N, N) f32 stacked masked adjacencies (scenario-major rows).
    a_sel : (S, S*N) f32 block-diagonal selector holding A[s, node_idx, :].
    Returns (S, C_PAD) f32 logits of the node_idx row per scenario.
    """
    sn, n = a_flat.shape
    s = a_sel.shape[0]
    f_in = x.shape[1]
    hidden = w1.shape[1]
    c_pad = w2.shape[1]

    return pl.pallas_call(
        _fused_gnn_kernel,
        out_shape=jax.ShapeDtypeStruct((s, c_pad), jnp.float32),
        grid=(1,),
        in_specs=[
            pl.BlockSpec((sn, n), lambda i: (0, 0)),        # A_flat (all scenarios)
            pl.BlockSpec((s, sn), lambda i: (0, 0)),        # A_sel (node rows)
            pl.BlockSpec((n, f_in), lambda i: (0, 0)),      # X
            pl.BlockSpec((f_in, hidden), lambda i: (0, 0)),  # W1
            pl.BlockSpec((1, hidden), lambda i: (0, 0)),     # b1
            pl.BlockSpec((hidden, c_pad), lambda i: (0, 0)),  # W2 (lane-padded)
            pl.BlockSpec((1, c_pad), lambda i: (0, 0)),       # b2 (lane-padded)
        ],
        out_specs=pl.BlockSpec((s, c_pad), lambda i: (0, 0)),
        compiler_params=pltpu.CompilerParams(
            dimension_semantics=("arbitrary",)),
    )(a_flat, a_sel, x, w1, b1, w2, b2)


# ----------------------------------------------------------------------------
# Glue: batched dense masked adjacency via one-hot matmuls (no scatter-add).
# Full mask length = num_edges + num_nodes (self-loop slots included, matching
# the PyG __edge_mask__ created in connect_mask.__enter__).
# ----------------------------------------------------------------------------
@functools.partial(jax.jit, static_argnames=("node_idx",))
def batched_node_probs(x, edge_index, scenario_masks, params, *, node_idx):
    """All scenarios -> softmax class probabilities at node_idx: (S, C)."""
    num_nodes = x.shape[0]
    num_edges = edge_index.shape[1]
    num_classes = params["w2"].shape[1]
    s = scenario_masks.shape[0]

    w = jax.nn.sigmoid(scenario_masks)          # sigmoid(+inf)=1, sigmoid(-inf)=0
    w_edge = w[:, :num_edges]                   # (S, E)
    w_self = w[:, num_edges:num_edges + num_nodes]  # (S, N)

    src, dst = edge_index[0], edge_index[1]
    onehot_src = jax.nn.one_hot(src, num_nodes, dtype=jnp.float32)  # (E, N)
    onehot_dst = jax.nn.one_hot(dst, num_nodes, dtype=jnp.float32)  # (E, N)

    # A[s, i, j] = sum_e [dst_e == i] * w_edge[s, e] * [src_e == j]
    #   (duplicate edges sum, matching sum aggregation)
    weighted_dst = w_edge[:, :, None] * onehot_dst[None, :, :]       # (S, E, N)
    a = jnp.einsum("sei,ej->sij", weighted_dst, onehot_src)          # (S, N, N)
    # masked self loops on the diagonal
    a = a + jnp.eye(num_nodes, dtype=jnp.float32)[None, :, :] * w_self[:, None, :]
    # TODO(synk): if the wrapped PyG model is GCNConv-like, degree
    # normalization of A would be required here to match it exactly.

    # Layer-1 feed: scenario-major stacked rows.
    a_flat = a.reshape(s * num_nodes, num_nodes)                     # (S*N, N)

    # Layer-2 feed: block-diagonal selector with each scenario's node_idx row.
    a_node = a[:, node_idx, :]                                       # (S, N)
    a_sel = (jnp.eye(s, dtype=jnp.float32)[:, :, None]
             * a_node[:, None, :]).reshape(s, s * num_nodes)         # (S, S*N)

    # Pad classes into a lane-dense 128-wide output slab (f32 throughout).
    w2p = jnp.zeros((params["w2"].shape[0], C_PAD), jnp.float32)
    w2p = w2p.at[:, :num_classes].set(params["w2"])
    b2p = jnp.zeros((1, C_PAD), jnp.float32).at[:, :num_classes].set(params["b2"])

    logits = fused_gnn_forward(a_flat, a_sel, x, params["w1"], params["b1"],
                               w2p, b2p)                             # (S, C_PAD)
    logits = logits[:, :num_classes]
    return jax.nn.softmax(logits, axis=-1)


# ----------------------------------------------------------------------------
# ExplanationProcessor equivalent
# ----------------------------------------------------------------------------
class XCollector:
    """Minimal stand-in for the DIG data collector."""

    def __init__(self):
        self.masks = []
        self.related_preds = []
        self.targets = []

    def collect_data(self, masks, related_preds, label):
        self.masks.append(masks)
        self.related_preds.append(related_preds)
        self.targets.append(label)


class ExplanationProcessor:
    def __init__(self, params):
        self.params = params
        self.num_layers = 2  # two message-passing layers in the synthetic model

    def eval_related_pred(self, x, edge_index, masks, node_idx=0):
        num_edges = edge_index.shape[1]
        num_nodes = x.shape[0]
        mask_size = num_edges + num_nodes
        n_labels = len(masks)

        # Scenario stack (deduped): [origin(+inf), zero(-inf),
        #                            masked_0..L-1, maskout_0..L-1]
        inf_mask = jnp.full((mask_size,), jnp.inf, dtype=jnp.float32)
        mask_stack = jnp.stack(masks).astype(jnp.float32)      # (L, E+N)
        scenarios = jnp.concatenate(
            [inf_mask[None], -inf_mask[None], mask_stack, -mask_stack], axis=0)

        probs = batched_node_probs(x, edge_index, scenarios, self.params,
                                   node_idx=node_idx)
        probs = jax.device_get(jax.block_until_ready(probs))   # single sync

        related_preds = []
        for label in range(n_labels):
            related_preds.append({
                "zero": float(probs[1, label]),
                "masked": float(probs[2 + label, label]),
                "maskout": float(probs[2 + n_labels + label, label]),
                "origin": float(probs[0, label]),
            })
        return related_preds

    def forward(self, x, edge_index, y, masks, x_collector, node_idx=None):
        # TODO(synk): the original calls breakpoint() and mutates live
        # nn.Parameter.data on PyG MessagePassing hooks; here the mask is
        # passed functionally into the model instead.
        y_idx = 0 if node_idx is None else node_idx
        assert not bool(jnp.isnan(jnp.squeeze(y[y_idx]).astype(jnp.float32)))
        related_preds = self.eval_related_pred(
            x, edge_index, masks, node_idx=0 if node_idx is None else node_idx)
        x_collector.collect_data(masks, related_preds,
                                 int(jnp.squeeze(y[y_idx])))
        return related_preds


# ----------------------------------------------------------------------------
# Main
# ----------------------------------------------------------------------------
if __name__ == "__main__":
    key = jax.random.PRNGKey(0)
    k_x, k_w1, k_b1, k_w2, k_b2, k_mask = jax.random.split(key, 6)

    num_nodes = 8
    num_edges = 16
    feat_dim = 32
    hidden_dim = 32
    num_classes = 4

    # Deterministic synthetic graph: ring + a few extra chords.
    src = jnp.arange(num_edges, dtype=jnp.int32) % num_nodes
    dst = (jnp.arange(num_edges, dtype=jnp.int32) * 3 + 1) % num_nodes
    edge_index = jnp.stack([src, dst], axis=0)  # (2, E)

    x = jax.random.normal(k_x, (num_nodes, feat_dim), dtype=jnp.float32)
    y = jnp.arange(num_nodes, dtype=jnp.int32) % num_classes

    params = {
        "w1": jax.random.normal(k_w1, (feat_dim, hidden_dim), jnp.float32) * 0.1,
        "b1": jax.random.normal(k_b1, (1, hidden_dim), jnp.float32) * 0.01,
        "w2": jax.random.normal(k_w2, (hidden_dim, num_classes), jnp.float32) * 0.1,
        "b2": jax.random.normal(k_b2, (1, num_classes), jnp.float32) * 0.01,
    }

    # One candidate edge mask per class label, size = num_edges + num_nodes
    # (self-loop slots included, as in connect_mask.__enter__).
    masks = [
        jax.random.normal(jax.random.fold_in(k_mask, i),
                          (num_edges + num_nodes,), jnp.float32)
        for i in range(num_classes)
    ]

    processor = ExplanationProcessor(params)
    collector = XCollector()
    related_preds = processor.forward(x, edge_index, y, masks, collector,
                                      node_idx=0)

    # Sanity: every scenario produced a valid probability.
    for entry in related_preds:
        for k in ("zero", "masked", "maskout", "origin"):
            v = entry[k]
            assert 0.0 <= v <= 1.0 and v == v  # in range and not NaN

    print("KERNEL_OK")
</pallas_src>

<mosaic_0001>
module attributes {stable_mosaic.version = 11 : i64} {
  func.func @_fused_gnn_kernel(%arg0: i32, %arg1: memref<80x8xf32, #tpu.memory_space<vmem>>, %arg2: memref<10x80xf32, #tpu.memory_space<vmem>>, %arg3: memref<8x32xf32, #tpu.memory_space<vmem>>, %arg4: memref<32x32xf32, #tpu.memory_space<vmem>>, %arg5: memref<1x32xf32, #tpu.memory_space<vmem>>, %arg6: memref<32x128xf32, #tpu.memory_space<vmem>>, %arg7: memref<1x128xf32, #tpu.memory_space<vmem>>, %arg8: memref<10x128xf32, #tpu.memory_space<vmem>>) attributes {dimension_semantics = [#tpu.dimension_semantics<arbitrary>], iteration_bounds = array<i64: 1>, scalar_prefetch = 0 : i64, scratch_operands = 0 : i64, tpu.core_type = #tpu.core_type<tc>, window_params = [{pipeline_mode = #tpu.pipeline_mode<synchronous>, transform_indices = @transform_0, window_bounds = array<i64: 80, 8>}, {pipeline_mode = #tpu.pipeline_mode<synchronous>, transform_indices = @transform_1, window_bounds = array<i64: 10, 80>}, {pipeline_mode = #tpu.pipeline_mode<synchronous>, transform_indices = @transform_2, window_bounds = array<i64: 8, 32>}, {pipeline_mode = #tpu.pipeline_mode<synchronous>, transform_indices = @transform_3, window_bounds = array<i64: 32, 32>}, {pipeline_mode = #tpu.pipeline_mode<synchronous>, transform_indices = @transform_4, window_bounds = array<i64: 1, 32>}, {pipeline_mode = #tpu.pipeline_mode<synchronous>, transform_indices = @transform_5, window_bounds = array<i64: 32, 128>}, {pipeline_mode = #tpu.pipeline_mode<synchronous>, transform_indices = @transform_6, window_bounds = array<i64: 1, 128>}, {pipeline_mode = #tpu.pipeline_mode<synchronous>, transform_indices = @transform_7, window_bounds = array<i64: 10, 128>}]} {
    %c0 = arith.constant 0 : index
    %c0_0 = arith.constant 0 : index
    %0 = vector.load %arg1[%c0, %c0_0] : memref<80x8xf32, #tpu.memory_space<vmem>>, vector<80x8xf32>
    %c0_1 = arith.constant 0 : index
    %c0_2 = arith.constant 0 : index
    %1 = vector.load %arg3[%c0_1, %c0_2] : memref<8x32xf32, #tpu.memory_space<vmem>>, vector<8x32xf32>
    %cst = arith.constant dense<0.000000e+00> : vector<80x32xf32>
    %2 = tpu.matmul %0, %1, %cst {dimension_numbers = #tpu.dot_dimension_numbers<[1], [0], [0], [1], [0, 0, 1, 1], [], []>} : vector<80x8xf32>, vector<8x32xf32>, vector<80x32xf32> -> vector<80x32xf32>
    %c0_3 = arith.constant 0 : index
    %c0_4 = arith.constant 0 : index
    %3 = vector.load %arg4[%c0_3, %c0_4] : memref<32x32xf32, #tpu.memory_space<vmem>>, vector<32x32xf32>
    %cst_5 = arith.constant dense<0.000000e+00> : vector<80x32xf32>
    %4 = tpu.matmul %2, %3, %cst_5 {dimension_numbers = #tpu.dot_dimension_numbers<[1], [0], [0], [1], [0, 0, 1, 1], [], []>} : vector<80x32xf32>, vector<32x32xf32>, vector<80x32xf32> -> vector<80x32xf32>
    %c0_6 = arith.constant 0 : index
    %c0_7 = arith.constant 0 : index
    %5 = vector.load %arg5[%c0_6, %c0_7] : memref<1x32xf32, #tpu.memory_space<vmem>>, vector<1x32xf32>
    %6 = vector.broadcast %5 : vector<1x32xf32> to vector<80x32xf32>
    %7 = arith.addf %4, %6 : vector<80x32xf32>
    %cst_8 = arith.constant 0.000000e+00 : f32
    %8 = vector.broadcast %cst_8 : f32 to vector<80x32xf32>
    %9 = arith.maximumf %7, %8 : vector<80x32xf32>
    %c0_9 = arith.constant 0 : index
    %c0_10 = arith.constant 0 : index
    %10 = vector.load %arg2[%c0_9, %c0_10] : memref<10x80xf32, #tpu.memory_space<vmem>>, vector<10x80xf32>
    %cst_11 = arith.constant dense<0.000000e+00> : vector<10x32xf32>
    %11 = tpu.matmul %10, %9, %cst_11 {dimension_numbers = #tpu.dot_dimension_numbers<[1], [0], [0], [1], [0, 0, 1, 1], [], []>} : vector<10x80xf32>, vector<80x32xf32>, vector<10x32xf32> -> vector<10x32xf32>
    %c0_12 = arith.constant 0 : index
    %c0_13 = arith.constant 0 : index
    %12 = vector.load %arg6[%c0_12, %c0_13] : memref<32x128xf32, #tpu.memory_space<vmem>>, vector<32x128xf32>
    %cst_14 = arith.constant dense<0.000000e+00> : vector<10x128xf32>
    %13 = tpu.matmul %11, %12, %cst_14 {dimension_numbers = #tpu.dot_dimension_numbers<[1], [0], [0], [1], [0, 0, 1, 1], [], []>} : vector<10x32xf32>, vector<32x128xf32>, vector<10x128xf32> -> vector<10x128xf32>
    %c0_15 = arith.constant 0 : index
    %c0_16 = arith.constant 0 : index
    %14 = vector.load %arg7[%c0_15, %c0_16] : memref<1x128xf32, #tpu.memory_space<vmem>>, vector<1x128xf32>
    %15 = vector.broadcast %14 : vector<1x128xf32> to vector<10x128xf32>
    %16 = arith.addf %13, %15 : vector<10x128xf32>
    %c0_17 = arith.constant 0 : index
    %c0_18 = arith.constant 0 : index
    %17 = vector.load %arg8[%c0_17, %c0_18] : memref<10x128xf32, #tpu.memory_space<vmem>>, vector<10x128xf32>
    tpu.vector_store %arg8[%c0_17, %c0_18], %16 {strides = array<i32>} : memref<10x128xf32, #tpu.memory_space<vmem>>, vector<10x128xf32>,
    return
  }
  func.func @transform_0(%arg0: i32) -> (i32, i32) {
    %c0_i32 = arith.constant 0 : i32
    %c0_i32_0 = arith.constant 0 : i32
    %c0_i32_1 = arith.constant 0 : i32
    return %c0_i32, %c0_i32_0 : i32, i32
  }
  func.func @transform_1(%arg0: i32) -> (i32, i32) {
    %c0_i32 = arith.constant 0 : i32
    %c0_i32_0 = arith.constant 0 : i32
    %c0_i32_1 = arith.constant 0 : i32
    return %c0_i32, %c0_i32_0 : i32, i32
  }
  func.func @transform_2(%arg0: i32) -> (i32, i32) {
    %c0_i32 = arith.constant 0 : i32
    %c0_i32_0 = arith.constant 0 : i32
    %c0_i32_1 = arith.constant 0 : i32
    return %c0_i32, %c0_i32_0 : i32, i32
  }
  func.func @transform_3(%arg0: i32) -> (i32, i32) {
    %c0_i32 = arith.constant 0 : i32
    %c0_i32_0 = arith.constant 0 : i32
    %c0_i32_1 = arith.constant 0 : i32
    return %c0_i32, %c0_i32_0 : i32, i32
  }
  func.func @transform_4(%arg0: i32) -> (i32, i32) {
    %c0_i32 = arith.constant 0 : i32
    %c0_i32_0 = arith.constant 0 : i32
    %c0_i32_1 = arith.constant 0 : i32
    return %c0_i32, %c0_i32_0 : i32, i32
  }
  func.func @transform_5(%arg0: i32) -> (i32, i32) {
    %c0_i32 = arith.constant 0 : i32
    %c0_i32_0 = arith.constant 0 : i32
    %c0_i32_1 = arith.constant 0 : i32
    return %c0_i32, %c0_i32_0 : i32, i32
  }
  func.func @transform_6(%arg0: i32) -> (i32, i32) {
    %c0_i32 = arith.constant 0 : i32
    %c0_i32_0 = arith.constant 0 : i32
    %c0_i32_1 = arith.constant 0 : i32
    return %c0_i32, %c0_i32_0 : i32, i32
  }
  func.func @transform_7(%arg0: i32) -> (i32, i32) {
    %c0_i32 = arith.constant 0 : i32
    %c0_i32_0 = arith.constant 0 : i32
    %c0_i32_1 = arith.constant 0 : i32
    return %c0_i32, %c0_i32_0 : i32, i32
  }
}

</mosaic_0001>

<llo_original>
// kernel: batched_node_probs.1
$region0: #{batched_node_probs.1}
  #allocation0 [shape = 'u32[]', space=smem, size = 0x4, offset = 0x4, fixed_abs, tag = 'smem constant byte address 0x4 - core index']
  #allocation1 [shape = 'u32[144,128]{1,0:T(1,128)}', space=vmem, size = 0x12000, scoped, tag = 'internal scratch']
  %s0 = inlined_call_operand.vmem [shape: f32[80,8], index: 0, kind: input, shape index: {}]
  %s1 = inlined_call_operand.vmem [shape: f32[10,80], index: 1, kind: input, shape index: {}]
  %s2 = inlined_call_operand.vmem [shape: f32[8,32], index: 2, kind: input, shape index: {}]
  %s3 = inlined_call_operand.vmem [shape: f32[32,32], index: 3, kind: input, shape index: {}]
  %s4 = inlined_call_operand.vmem [shape: f32[1,32], index: 4, kind: input, shape index: {}]
  %s5 = inlined_call_operand.vmem [shape: f32[32,128], index: 5, kind: input, shape index: {}]
  %s6 = inlined_call_operand.vmem [shape: f32[1,128], index: 6, kind: input, shape index: {}]
  %s7 = inlined_call_operand.vmem [shape: f32[10,128], index: 7, kind: output, shape index: {}]
  %s8 = sld [smem:[#allocation0]]
  $region38: #{batched_node_probs.1} parent=0
    _
  %s10 = ssub.s32 1, %s8
  %s11 = scalar_select 0, %s10, %s8
  // Predicated region
  $region2: #{batched_node_probs.1} parent=0 // pred_check
    _
  $region3: #{batched_node_probs.1} parent=0 // pred_check_branch
    %13 = sbr.rel (0) target = $region5
  $region4: #{batched_node_probs.1} parent=0 // pred_region
    _
  $region5: #{batched_node_probs.1} parent=0 // pred_fallthru
    _
  // Predicated region
  $region6: #{batched_node_probs.1} parent=0 // pred_check
    _
  $region7: #{batched_node_probs.1} parent=0 // pred_check_branch
    %15 = sbr.rel (0) target = $region9
  $region8: #{batched_node_probs.1} parent=0 // pred_region
    _
  $region9: #{batched_node_probs.1} parent=0 // pred_fallthru
    _
  // Predicated region
  $region10: #{batched_node_probs.1} parent=0 // pred_check
    _
  $region11: #{batched_node_probs.1} parent=0 // pred_check_branch
    %17 = sbr.rel (0) target = $region13
  $region12: #{batched_node_probs.1} parent=0 // pred_region
    _
  $region13: #{batched_node_probs.1} parent=0 // pred_fallthru
    _
  // Predicated region
  $region14: #{batched_node_probs.1} parent=0 // pred_check
    _
  $region15: #{batched_node_probs.1} parent=0 // pred_check_branch
    %19 = sbr.rel (0) target = $region17
  $region16: #{batched_node_probs.1} parent=0 // pred_region
    _
  $region17: #{batched_node_probs.1} parent=0 // pred_fallthru
    _
  // Predicated region
  $region18: #{batched_node_probs.1} parent=0 // pred_check
    _
  $region19: #{batched_node_probs.1} parent=0 // pred_check_branch
    %21 = sbr.rel (0) target = $region21
  $region20: #{batched_node_probs.1} parent=0 // pred_region
    _
  $region21: #{batched_node_probs.1} parent=0 // pred_fallthru
    _
  // Predicated region
  $region22: #{batched_node_probs.1} parent=0 // pred_check
    _
  $region23: #{batched_node_probs.1} parent=0 // pred_check_branch
    %23 = sbr.rel (0) target = $region25
  $region24: #{batched_node_probs.1} parent=0 // pred_region
    _
  $region25: #{batched_node_probs.1} parent=0 // pred_fallthru
    _
  // Predicated region
  $region26: #{batched_node_probs.1} parent=0 // pred_check
    _
  $region27: #{batched_node_probs.1} parent=0 // pred_check_branch
    %25 = sbr.rel (0) target = $region29
  $region28: #{batched_node_probs.1} parent=0 // pred_region
    _
  $region29: #{batched_node_probs.1} parent=0 // pred_fallthru
    _
  %v26 = vld [vmem:[%s0] sm:$0xff]
  %v27 = vld [vmem:[%s0 + $0x8] sm:$0xff]
  %v28 = vld [vmem:[%s0 + $0x10] sm:$0xff]
  %v29 = vld [vmem:[%s0 + $0x18] sm:$0xff]
  %v30 = vld [vmem:[%s0 + $0x20] sm:$0xff]
  %v31 = vld [vmem:[%s0 + $0x28] sm:$0xff]
  %v32 = vld [vmem:[%s0 + $0x30] sm:$0xff]
  %v33 = vld [vmem:[%s0 + $0x38] sm:$0xff]
  %v34 = vld [vmem:[%s0 + $0x40] sm:$0xff]
  %v35 = vld [vmem:[%s0 + $0x48] sm:$0xff]
  %v36 = vld [vmem:[%s2] sm:$0xff]
  %vm37 = vcmask 64512
  %v39 = vsel %vm37, %v26, 0
  %v42 = vsel %vm37, %v27, 0
  %v45 = vsel %vm37, %v28, 0
  %v48 = vsel %vm37, %v29, 0
  %v51 = vsel %vm37, %v30, 0
  %v54 = vsel %vm37, %v31, 0
  %v57 = vsel %vm37, %v32, 0
  %v60 = vsel %vm37, %v33, 0
  %v63 = vsel %vm37, %v34, 0
  %v66 = vsel %vm37, %v35, 0
  %68 = vmatprep.subr.mxu0 0.0
  %69 = vmatpush1.msra.mxu0 %v36
  %70 = vmatprep.subr.mxu0 0.0
  %71 = vmatpush1.msra.mxu0 0.0
  %72 = vmatprep.subr.mxu0 0.0
  %73 = vmatpush1.msra.mxu0 0.0
  %74 = vmatprep.subr.mxu0 0.0
  %75 = vmatpush1.msra.mxu0 0.0
  %76 = vmatprep.subr.mxu0 0.0
  %77 = vmatpush1.msra.mxu0 0.0
  %78 = vmatprep.subr.mxu0 0.0
  %79 = vmatpush1.msra.mxu0 0.0
  %80 = vmatprep.subr.mxu0 0.0
  %81 = vmatpush1.msra.mxu0 0.0
  %82 = vmatprep.subr.mxu0 0.0
  %83 = vmatpush1.msra.mxu0 0.0
  %84 = vmatprep.subr.mxu0 0.0
  %85 = vmatpush1.msra.mxu0 0.0
  %86 = vmatprep.subr.mxu0 0.0
  %87 = vmatpush1.msra.mxu0 0.0
  %88 = vmatprep.subr.mxu0 0.0
  %89 = vmatpush1.msra.mxu0 0.0
  %90 = vmatprep.subr.mxu0 0.0
  %91 = vmatpush1.msra.mxu0 0.0
  %92 = vmatprep.subr.mxu0 0.0
  %93 = vmatpush1.msra.mxu0 0.0
  %94 = vmatprep.subr.mxu0 0.0
  %95 = vmatpush1.msra.mxu0 0.0
  %96 = vmatprep.subr.mxu0 0.0
  %97 = vmatpush1.msra.mxu0 0.0
  %98 = vmatprep.subr.mxu0 0.0
  %99 = vmatpush1.msra.mxu0 0.0
  %100 = vmatprep.subr.mxu0 0.0
  %101 = vmatpush1.msra.mxu0 0.0
  %102 = vmatprep.subr.mxu0 0.0
  %103 = vmatpush1.msra.mxu0 0.0
  %104 = vmatprep.subr.mxu0 0.0
  %105 = vmatpush1.msra.mxu0 0.0
  %106 = vmatprep.subr.mxu0 0.0
  %107 = vmatpush1.msra.mxu0 0.0
  %108 = vmatprep.subr.mxu0 0.0
  %109 = vmatpush1.msra.mxu0 0.0
  %110 = vmatprep.subr.mxu0 0.0
  %111 = vmatpush1.msra.mxu0 0.0
  %112 = vmatprep.subr.mxu0 0.0
  %113 = vmatpush1.msra.mxu0 0.0
  %114 = vmatprep.subr.mxu0 0.0
  %115 = vmatpush1.msra.mxu0 0.0
  %116 = vmatprep.subr.mxu0 0.0
  %117 = vmatpush1.msra.mxu0 0.0
  %118 = vmatprep.subr.mxu0 0.0
  %119 = vmatpush1.msra.mxu0 0.0
  %120 = vmatprep.subr.mxu0 0.0
  %121 = vmatpush1.msra.mxu0 0.0
  %122 = vmatprep.subr.mxu0 0.0
  %123 = vmatpush1.msra.mxu0 0.0
  %124 = vmatprep.subr.mxu0 0.0
  %125 = vmatpush1.msra.mxu0 0.0
  %126 = vmatprep.subr.mxu0 0.0
  %127 = vmatpush1.msra.mxu0 0.0
  %128 = vmatprep.subr.mxu0 0.0
  %129 = vmatpush1.msra.mxu0 0.0
  %130 = vmatprep.subr.mxu0 0.0
  %131 = vmatpush1.msra.mxu0 0.0
  %132 = vmatprep.mubr.f32.mxu0 0.0
  %133 = vmatmul.mubr.f32.gmra.mrb[0].mxu0 %v39
  %v134 = vpop.f32.mrb[0].mxu0
  %v135 = vadd.f32 0.0, %v134
  %v136 = vpop.f32.mrb[0].mxu0
  %137 = vmatprep.mubr.f32.mxu0 0.0
  %138 = vmatmul.mubr.f32.gmra.mrb[0].mxu0 %v42
  %v139 = vpop.f32.mrb[0].mxu0
  %v140 = vadd.f32 0.0, %v139
  %v141 = vpop.f32.mrb[0].mxu0
  %142 = vmatprep.mubr.f32.mxu0 0.0
  %143 = vmatmul.mubr.f32.gmra.mrb[0].mxu0 %v45
  %v144 = vpop.f32.mrb[0].mxu0
  %v145 = vadd.f32 0.0, %v144
  %v146 = vpop.f32.mrb[0].mxu0
  %147 = vmatprep.mubr.f32.mxu0 0.0
  %148 = vmatmul.mubr.f32.gmra.mrb[0].mxu0 %v48
  %v149 = vpop.f32.mrb[0].mxu0
  %v150 = vadd.f32 0.0, %v149
  %v151 = vpop.f32.mrb[0].mxu0
  %152 = vmatprep.mubr.f32.mxu0 0.0
  %153 = vmatmul.mubr.f32.gmra.mrb[0].mxu0 %v51
  %v154 = vpop.f32.mrb[0].mxu0
  %v155 = vadd.f32 0.0, %v154
  %v156 = vpop.f32.mrb[0].mxu0
  %157 = vmatprep.mubr.f32.mxu0 0.0
  %158 = vmatmul.mubr.f32.gmra.mrb[0].mxu0 %v54
  %v159 = vpop.f32.mrb[0].mxu0
  %v160 = vadd.f32 0.0, %v159
  %v161 = vpop.f32.mrb[0].mxu0
  %162 = vmatprep.mubr.f32.mxu0 0.0
  %163 = vmatmul.mubr.f32.gmra.mrb[0].mxu0 %v57
  %v164 = vpop.f32.mrb[0].mxu0
  %v165 = vadd.f32 0.0, %v164
  %v166 = vpop.f32.mrb[0].mxu0
  %167 = vmatprep.mubr.f32.mxu0 0.0
  %168 = vmatmul.mubr.f32.gmra.mrb[0].mxu0 %v60
  %v169 = vpop.f32.mrb[0].mxu0
  %v170 = vadd.f32 0.0, %v169
  %v171 = vpop.f32.mrb[0].mxu0
  %172 = vmatprep.mubr.f32.mxu0 0.0
  %173 = vmatmul.mubr.f32.gmra.mrb[0].mxu0 %v63
  %v174 = vpop.f32.mrb[0].mxu0
  %v175 = vadd.f32 0.0, %v174
  %v176 = vpop.f32.mrb[0].mxu0
  %177 = vmatprep.mubr.f32.mxu0 0.0
  %178 = vmatmul.mubr.f32.gmra.mrb[0].mxu0 %v66
  %v179 = vpop.f32.mrb[0].mxu0
  %v180 = vadd.f32 0.0, %v179
  %v181 = vpop.f32.mrb[0].mxu0
  %182 = vdwg.mxu0
  %v183 = vld [vmem:[%s3] sm:$0xff]
  %v184 = vld [vmem:[%s3 + $0x8] sm:$0xff]
  %v185 = vld [vmem:[%s3 + $0x10] sm:$0xff]
  %v186 = vld [vmem:[%s3 + $0x18] sm:$0xff]
  %v187 = vld [vmem:[%s4] sm:$0x1]
  %v189 = vlaneseq
  %v190 = vshrl.u32 %v189, 7
  %v191 = vsub.s32 0, %v190
  %v192 = vrot.slane %v187, %v191
  %vm194 = vcmask 261120
  %v196 = vsel %vm194, %v135, 0
  %v199 = vsel %vm194, %v140, 0
  %v202 = vsel %vm194, %v145, 0
  %v205 = vsel %vm194, %v150, 0
  %v208 = vsel %vm194, %v155, 0
  %v211 = vsel %vm194, %v160, 0
  %v214 = vsel %vm194, %v165, 0
  %v217 = vsel %vm194, %v170, 0
  %v220 = vsel %vm194, %v175, 0
  %v223 = vsel %vm194, %v180, 0
  %225 = vmatprep.subr.mxu0 0.0
  %226 = vmatpush1.msra.mxu0 %v183
  %227 = vmatprep.subr.mxu0 0.0
  %228 = vmatpush1.msra.mxu0 %v184
  %229 = vmatprep.subr.mxu0 0.0
  %230 = vmatpush1.msra.mxu0 %v185
  %231 = vmatprep.subr.mxu0 0.0
  %232 = vmatpush1.msra.mxu0 %v186
  %233 = vmatprep.subr.mxu0 0.0
  %234 = vmatpush1.msra.mxu0 0.0
  %235 = vmatprep.subr.mxu0 0.0
  %236 = vmatpush1.msra.mxu0 0.0
  %237 = vmatprep.subr.mxu0 0.0
  %238 = vmatpush1.msra.mxu0 0.0
  %239 = vmatprep.subr.mxu0 0.0
  %240 = vmatpush1.msra.mxu0 0.0
  %241 = vmatprep.subr.mxu0 0.0
  %242 = vmatpush1.msra.mxu0 0.0
  %243 = vmatprep.subr.mxu0 0.0
  %244 = vmatpush1.msra.mxu0 0.0
  %245 = vmatprep.subr.mxu0 0.0
  %246 = vmatpush1.msra.mxu0 0.0
  %247 = vmatprep.subr.mxu0 0.0
  %248 = vmatpush1.msra.mxu0 0.0
  %249 = vmatprep.subr.mxu0 0.0
  %250 = vmatpush1.msra.mxu0 0.0
  %251 = vmatprep.subr.mxu0 0.0
  %252 = vmatpush1.msra.mxu0 0.0
  %253 = vmatprep.subr.mxu0 0.0
  %254 = vmatpush1.msra.mxu0 0.0
  %255 = vmatprep.subr.mxu0 0.0
  %256 = vmatpush1.msra.mxu0 0.0
  %257 = vmatprep.subr.mxu0 0.0
  %258 = vmatpush1.msra.mxu0 0.0
  %259 = vmatprep.subr.mxu0 0.0
  %260 = vmatpush1.msra.mxu0 0.0
  %261 = vmatprep.subr.mxu0 0.0
  %262 = vmatpush1.msra.mxu0 0.0
  %263 = vmatprep.subr.mxu0 0.0
  %264 = vmatpush1.msra.mxu0 0.0
  %265 = vmatprep.subr.mxu0 0.0
  %266 = vmatpush1.msra.mxu0 0.0
  %267 = vmatprep.subr.mxu0 0.0
  %268 = vmatpush1.msra.mxu0 0.0
  %269 = vmatprep.subr.mxu0 0.0
  %270 = vmatpush1.msra.mxu0 0.0
  %271 = vmatprep.subr.mxu0 0.0
  %272 = vmatpush1.msra.mxu0 0.0
  %273 = vmatprep.subr.mxu0 0.0
  %274 = vmatpush1.msra.mxu0 0.0
  %275 = vmatprep.subr.mxu0 0.0
  %276 = vmatpush1.msra.mxu0 0.0
  %277 = vmatprep.subr.mxu0 0.0
  %278 = vmatpush1.msra.mxu0 0.0
  %279 = vmatprep.subr.mxu0 0.0
  %280 = vmatpush1.msra.mxu0 0.0
  %281 = vmatprep.subr.mxu0 0.0
  %282 = vmatpush1.msra.mxu0 0.0
  %283 = vmatprep.subr.mxu0 0.0
  %284 = vmatpush1.msra.mxu0 0.0
  %285 = vmatprep.subr.mxu0 0.0
  %286 = vmatpush1.msra.mxu0 0.0
  %287 = vmatprep.subr.mxu0 0.0
  %288 = vmatpush1.msra.mxu0 0.0
  %289 = vmatprep.mubr.f32.mxu0 0.0
  %290 = vmatmul.mubr.f32.gmra.mrb[0].mxu0 %v196
  %v291 = vpop.f32.mrb[0].mxu0
  %v292 = vadd.f32 %v192, %v291
  %v293 = vpop.f32.mrb[0].mxu0
  %294 = vmatprep.mubr.f32.mxu0 0.0
  %295 = vmatmul.mubr.f32.gmra.mrb[0].mxu0 %v199
  %v296 = vpop.f32.mrb[0].mxu0
  %v297 = vadd.f32 %v192, %v296
  %v298 = vpop.f32.mrb[0].mxu0
  %299 = vmatprep.mubr.f32.mxu0 0.0
  %300 = vmatmul.mubr.f32.gmra.mrb[0].mxu0 %v202
  %v301 = vpop.f32.mrb[0].mxu0
  %v302 = vadd.f32 %v192, %v301
  %v303 = vpop.f32.mrb[0].mxu0
  %304 = vmatprep.mubr.f32.mxu0 0.0
  %305 = vmatmul.mubr.f32.gmra.mrb[0].mxu0 %v205
  %v306 = vpop.f32.mrb[0].mxu0
  %v307 = vadd.f32 %v192, %v306
  %v308 = vpop.f32.mrb[0].mxu0
  %309 = vmatprep.mubr.f32.mxu0 0.0
  %310 = vmatmul.mubr.f32.gmra.mrb[0].mxu0 %v208
  %v311 = vpop.f32.mrb[0].mxu0
  %v312 = vadd.f32 %v192, %v311
  %v313 = vpop.f32.mrb[0].mxu0
  %314 = vmatprep.mubr.f32.mxu0 0.0
  %315 = vmatmul.mubr.f32.gmra.mrb[0].mxu0 %v211
  %v316 = vpop.f32.mrb[0].mxu0
  %v317 = vadd.f32 %v192, %v316
  %v318 = vpop.f32.mrb[0].mxu0
  %319 = vmatprep.mubr.f32.mxu0 0.0
  %320 = vmatmul.mubr.f32.gmra.mrb[0].mxu0 %v214
  %v321 = vpop.f32.mrb[0].mxu0
  %v322 = vadd.f32 %v192, %v321
  %v323 = vpop.f32.mrb[0].mxu0
  %324 = vmatprep.mubr.f32.mxu0 0.0
  %325 = vmatmul.mubr.f32.gmra.mrb[0].mxu0 %v217
  %v326 = vpop.f32.mrb[0].mxu0
  %v327 = vadd.f32 %v192, %v326
  %v328 = vpop.f32.mrb[0].mxu0
  %329 = vmatprep.mubr.f32.mxu0 0.0
  %330 = vmatmul.mubr.f32.gmra.mrb[0].mxu0 %v220
  %v331 = vpop.f32.mrb[0].mxu0
  %v332 = vadd.f32 %v192, %v331
  %v333 = vpop.f32.mrb[0].mxu0
  %334 = vmatprep.mubr.f32.mxu0 0.0
  %335 = vmatmul.mubr.f32.gmra.mrb[0].mxu0 %v223
  %v336 = vpop.f32.mrb[0].mxu0
  %v337 = vadd.f32 %v192, %v336
  %v338 = vpop.f32.mrb[0].mxu0
  %339 = vdwg.mxu0
  %v340 = vmax.f32 %v292, 0.0
  %v341 = vmax.f32 %v297, 0.0
  %v342 = vmax.f32 %v302, 0.0
  %v343 = vmax.f32 %v307, 0.0
  %v344 = vmax.f32 %v312, 0.0
  %v345 = vmax.f32 %v317, 0.0
  %v346 = vmax.f32 %v322, 0.0
  %v347 = vmax.f32 %v327, 0.0
  %v348 = vmax.f32 %v332, 0.0
  %v349 = vmax.f32 %v337, 0.0
  %v350 = vld [vmem:[%s1] sm:$0xff]
  %v351 = vld [vmem:[%s1 + $0x8] sm:$0x3]
  %vm352 = vcmask 654336
  %v354 = vsel %vm352, %v350, 0
  %v357 = vsel %vm352, %v351, 0
  %359 = vmatprep.subr.mxu0 0.0
  %360 = vmatpush1.msra.mxu0 %v340
  %361 = vmatprep.subr.mxu0 0.0
  %362 = vmatpush1.msra.mxu0 %v341
  %363 = vmatprep.subr.mxu0 0.0
  %364 = vmatpush1.msra.mxu0 %v342
  %365 = vmatprep.subr.mxu0 0.0
  %366 = vmatpush1.msra.mxu0 %v343
  %367 = vmatprep.subr.mxu0 0.0
  %368 = vmatpush1.msra.mxu0 %v344
  %369 = vmatprep.subr.mxu0 0.0
  %370 = vmatpush1.msra.mxu0 %v345
  %371 = vmatprep.subr.mxu0 0.0
  %372 = vmatpush1.msra.mxu0 %v346
  %373 = vmatprep.subr.mxu0 0.0
  %374 = vmatpush1.msra.mxu0 %v347
  %375 = vmatprep.subr.mxu0 0.0
  %376 = vmatpush1.msra.mxu0 %v348
  %377 = vmatprep.subr.mxu0 0.0
  %378 = vmatpush1.msra.mxu0 %v349
  %379 = vmatprep.subr.mxu0 0.0
  %380 = vmatpush1.msra.mxu0 0.0
  %381 = vmatprep.subr.mxu0 0.0
  %382 = vmatpush1.msra.mxu0 0.0
  %383 = vmatprep.subr.mxu0 0.0
  %384 = vmatpush1.msra.mxu0 0.0
  %385 = vmatprep.subr.mxu0 0.0
  %386 = vmatpush1.msra.mxu0 0.0
  %387 = vmatprep.subr.mxu0 0.0
  %388 = vmatpush1.msra.mxu0 0.0
  %389 = vmatprep.subr.mxu0 0.0
  %390 = vmatpush1.msra.mxu0 0.0
  %391 = vmatprep.subr.mxu0 0.0
  %392 = vmatpush1.msra.mxu0 0.0
  %393 = vmatprep.subr.mxu0 0.0
  %394 = vmatpush1.msra.mxu0 0.0
  %395 = vmatprep.subr.mxu0 0.0
  %396 = vmatpush1.msra.mxu0 0.0
  %397 = vmatprep.subr.mxu0 0.0
  %398 = vmatpush1.msra.mxu0 0.0
  %399 = vmatprep.subr.mxu0 0.0
  %400 = vmatpush1.msra.mxu0 0.0
  %401 = vmatprep.subr.mxu0 0.0
  %402 = vmatpush1.msra.mxu0 0.0
  %403 = vmatprep.subr.mxu0 0.0
  %404 = vmatpush1.msra.mxu0 0.0
  %405 = vmatprep.subr.mxu0 0.0
  %406 = vmatpush1.msra.mxu0 0.0
  %407 = vmatprep.subr.mxu0 0.0
  %408 = vmatpush1.msra.mxu0 0.0
  %409 = vmatprep.subr.mxu0 0.0
  %410 = vmatpush1.msra.mxu0 0.0
  %411 = vmatprep.subr.mxu0 0.0
  %412 = vmatpush1.msra.mxu0 0.0
  %413 = vmatprep.subr.mxu0 0.0
  %414 = vmatpush1.msra.mxu0 0.0
  %415 = vmatprep.subr.mxu0 0.0
  %416 = vmatpush1.msra.mxu0 0.0
  %417 = vmatprep.subr.mxu0 0.0
  %418 = vmatpush1.msra.mxu0 0.0
  %419 = vmatprep.subr.mxu0 0.0
  %420 = vmatpush1.msra.mxu0 0.0
  %421 = vmatprep.subr.mxu0 0.0
  %422 = vmatpush1.msra.mxu0 0.0
  %423 = vmatprep.mubr.f32.mxu0 0.0
  %424 = vmatmul.mubr.f32.gmra.mrb[0].mxu0 %v354
  %v425 = vpop.f32.mrb[0].mxu0
  %v426 = vadd.f32 0.0, %v425
  %v427 = vpop.f32.mrb[0].mxu0
  %428 = vmatprep.mubr.f32.mxu0 0.0
  %429 = vmatmul.mubr.f32.gmra.mrb[0].mxu0 %v357
  %v430 = vpop.f32.mrb[0].mxu0
  %v431 = vadd.f32 0.0, %v430
  %v432 = vpop.f32.mrb[0].mxu0
  %433 = vdwg.mxu0
  %v434 = vld [vmem:[%s5] sm:$0xff]
  %v435 = vld [vmem:[%s5 + $0x8] sm:$0xff]
  %v436 = vld [vmem:[%s5 + $0x10] sm:$0xff]
  %v437 = vld [vmem:[%s5 + $0x18] sm:$0xff]
  %v438 = vld [vmem:[%s6] sm:$0x1]
  %v440 = vlaneseq
  %v441 = vshrl.u32 %v440, 7
  %v442 = vsub.s32 0, %v441
  %v443 = vrot.slane %v438, %v442
  %v446 = vsel %vm194, %v426, 0
  %v449 = vsel %vm194, %v431, 0
  %451 = vmatprep.subr.mxu0 0.0
  %452 = vmatpush1.msra.mxu0 %v434
  %453 = vmatprep.subr.mxu0 0.0
  %454 = vmatpush1.msra.mxu0 %v435
  %455 = vmatprep.subr.mxu0 0.0
  %456 = vmatpush1.msra.mxu0 %v436
  %457 = vmatprep.subr.mxu0 0.0
  %458 = vmatpush1.msra.mxu0 %v437
  %459 = vmatprep.subr.mxu0 0.0
  %460 = vmatpush1.msra.mxu0 0.0
  %461 = vmatprep.subr.mxu0 0.0
  %462 = vmatpush1.msra.mxu0 0.0
  %463 = vmatprep.subr.mxu0 0.0
  %464 = vmatpush1.msra.mxu0 0.0
  %465 = vmatprep.subr.mxu0 0.0
  %466 = vmatpush1.msra.mxu0 0.0
  %467 = vmatprep.subr.mxu0 0.0
  %468 = vmatpush1.msra.mxu0 0.0
  %469 = vmatprep.subr.mxu0 0.0
  %470 = vmatpush1.msra.mxu0 0.0
  %471 = vmatprep.subr.mxu0 0.0
  %472 = vmatpush1.msra.mxu0 0.0
  %473 = vmatprep.subr.mxu0 0.0
  %474 = vmatpush1.msra.mxu0 0.0
  %475 = vmatprep.subr.mxu0 0.0
  %476 = vmatpush1.msra.mxu0 0.0
  %477 = vmatprep.subr.mxu0 0.0
  %478 = vmatpush1.msra.mxu0 0.0
  %479 = vmatprep.subr.mxu0 0.0
  %480 = vmatpush1.msra.mxu0 0.0
  %481 = vmatprep.subr.mxu0 0.0
  %482 = vmatpush1.msra.mxu0 0.0
  %483 = vmatprep.subr.mxu0 0.0
  %484 = vmatpush1.msra.mxu0 0.0
  %485 = vmatprep.subr.mxu0 0.0
  %486 = vmatpush1.msra.mxu0 0.0
  %487 = vmatprep.subr.mxu0 0.0
  %488 = vmatpush1.msra.mxu0 0.0
  %489 = vmatprep.subr.mxu0 0.0
  %490 = vmatpush1.msra.mxu0 0.0
  %491 = vmatprep.subr.mxu0 0.0
  %492 = vmatpush1.msra.mxu0 0.0
  %493 = vmatprep.subr.mxu0 0.0
  %494 = vmatpush1.msra.mxu0 0.0
  %495 = vmatprep.subr.mxu0 0.0
  %496 = vmatpush1.msra.mxu0 0.0
  %497 = vmatprep.subr.mxu0 0.0
  %498 = vmatpush1.msra.mxu0 0.0
  %499 = vmatprep.subr.mxu0 0.0
  %500 = vmatpush1.msra.mxu0 0.0
  %501 = vmatprep.subr.mxu0 0.0
  %502 = vmatpush1.msra.mxu0 0.0
  %503 = vmatprep.subr.mxu0 0.0
  %504 = vmatpush1.msra.mxu0 0.0
  %505 = vmatprep.subr.mxu0 0.0
  %506 = vmatpush1.msra.mxu0 0.0
  %507 = vmatprep.subr.mxu0 0.0
  %508 = vmatpush1.msra.mxu0 0.0
  %509 = vmatprep.subr.mxu0 0.0
  %510 = vmatpush1.msra.mxu0 0.0
  %511 = vmatprep.subr.mxu0 0.0
  %512 = vmatpush1.msra.mxu0 0.0
  %513 = vmatprep.subr.mxu0 0.0
  %514 = vmatpush1.msra.mxu0 0.0
  %515 = vmatprep.mubr.f32.mxu0 0.0
  %516 = vmatmul.mubr.f32.gmra.mrb[0].mxu0 %v446
  %v517 = vpop.f32.mrb[0].mxu0
  %v518 = vadd.f32 %v443, %v517
  %v519 = vpop.f32.mrb[0].mxu0
  %520 = vmatprep.mubr.f32.mxu0 0.0
  %521 = vmatmul.mubr.f32.gmra.mrb[0].mxu0 %v449
  %v522 = vpop.f32.mrb[0].mxu0
  %v523 = vadd.f32 %v443, %v522
  %v524 = vpop.f32.mrb[0].mxu0
  %525 = vdwg.mxu0
  %526 = vst [vmem:[%s7] sm:$0xff] %v518
  %527 = vst [vmem:[%s7 + $0x8] sm:$0x3] %v523
  // Predicated region
  $region30: #{batched_node_probs.1} parent=0 // pred_check
    _
  $region31: #{batched_node_probs.1} parent=0 // pred_check_branch
    %529 = sbr.rel (0) target = $region33
  $region32: #{batched_node_probs.1} parent=0 // pred_region
    _
  $region33: #{batched_node_probs.1} parent=0 // pred_fallthru
    _
  // Predicated region
  $region34: #{batched_node_probs.1} parent=0 // pred_check
    _
  $region35: #{batched_node_probs.1} parent=0 // pred_check_branch
    %531 = sbr.rel (0) target = $region37
  $region36: #{batched_node_probs.1} parent=0 // pred_region
    _
  $region37: #{batched_node_probs.1} parent=0 // pred_fallthru
    _

</llo_original>
